<compile_context>
chip_gen: v7x
topology: tpu7x:2x2x1
jax: 0.10.0
libtpu: 0.0.40
codegen_flags: <defaults>
</compile_context>

<pallas_src>
import jax
import jax.numpy as jnp
from jax.experimental import pallas as pl
from jax.experimental.pallas import tpu as pltpu


def _round_up(n, m):
    return ((n + m - 1) // m) * m


def _affine(h, w, b, *, relu):
    """Feature-major affine layer on the VPU.

    h: [in, TB]   activations (batch on lanes)
    w: [out, in]  weight (PyTorch layout)
    b: [out, 1]   bias column
    returns [out, TB]
    """
    out_f, in_f = w.shape
    tb = h.shape[1]
    acc = jnp.broadcast_to(b, (out_f, tb))
    for k in range(in_f):                       # K is 2 or 8: unrolled FMAs
        acc = acc + w[:, k:k + 1] * h[k:k + 1, :]
    return jnp.maximum(acc, 0.0) if relu else acc


def credit_risk_kernel(xT_ref, w1_ref, b1_ref, w2_ref, b2_ref, w3_ref, b3_ref,
                       oT_ref):
    x = xT_ref[...]                                           # [2, TB]
    h1 = _affine(x, w1_ref[...], b1_ref[...], relu=True)      # [8, TB]
    h2 = _affine(h1, w2_ref[...], b2_ref[...], relu=True)     # [8, TB]
    z = _affine(h2, w3_ref[...], b3_ref[...], relu=False)     # [1, TB]
    # sigmoid: exp goes to the EUP; store is a lane-dense [1, TB] slab.
    oT_ref[...] = 1.0 / (1.0 + jnp.exp(-z))


def credit_risk_net(x, params, *, tb=4096):
    """x: [B, 2] float32 -> [B, 1] float32 probabilities."""
    w1, b1, w2, b2, w3, b3 = (params["w1"], params["b1"], params["w2"],
                              params["b2"], params["w3"], params["b3"])
    B = x.shape[0]
    # lane-aligned batch tile; pad B so the grid divides evenly.
    tb = max(128, _round_up(min(tb, _round_up(B, 128)), 128))
    Bp = _round_up(B, tb)
    xT = jnp.pad(x, ((0, Bp - B), (0, 0))).T                  # [2, Bp] feature-major

    def const_spec(shape):
        # full-array block, constant block index -> DMA'd once, VMEM-resident.
        return pl.BlockSpec(shape, lambda i: (0, 0))

    outT = pl.pallas_call(
        credit_risk_kernel,
        out_shape=jax.ShapeDtypeStruct((1, Bp), jnp.float32),
        grid=(Bp // tb,),
        in_specs=[
            pl.BlockSpec((2, tb), lambda i: (0, i)),          # x^T batch tile
            const_spec(w1.shape), const_spec(b1.shape),
            const_spec(w2.shape), const_spec(b2.shape),
            const_spec(w3.shape), const_spec(b3.shape),
        ],
        out_specs=pl.BlockSpec((1, tb), lambda i: (0, i)),
        compiler_params=pltpu.CompilerParams(
            dimension_semantics=("parallel",)),
        cost_estimate=pl.CostEstimate(
            flops=176 * Bp, transcendentals=Bp, bytes_accessed=12 * Bp),
    )(xT, w1, b1, w2, b2, w3, b3)

    return outT[0, :B][:, None]                               # back to [B, 1]


def init_params(key):
    """Deterministic init matching nn.Linear: w [out, in], b [out, 1]."""
    k1, k2, k3, k4, k5, k6 = jax.random.split(key, 6)

    def linear_init(kw, kb, fan_in, fan_out):
        # PyTorch nn.Linear default: U(-1/sqrt(fan_in), 1/sqrt(fan_in))
        bound = 1.0 / jnp.sqrt(jnp.float32(fan_in))
        w = jax.random.uniform(kw, (fan_out, fan_in), jnp.float32, -bound, bound)
        b = jax.random.uniform(kb, (fan_out, 1), jnp.float32, -bound, bound)
        return w, b

    w1, b1 = linear_init(k1, k2, 2, 8)
    w2, b2 = linear_init(k3, k4, 8, 8)
    w3, b3 = linear_init(k5, k6, 8, 1)
    return {"w1": w1, "b1": b1, "w2": w2, "b2": b2, "w3": w3, "b3": b3}


def reference(x, p):
    h1 = jnp.maximum(x @ p["w1"].T + p["b1"].T, 0.0)
    h2 = jnp.maximum(h1 @ p["w2"].T + p["b2"].T, 0.0)
    return jax.nn.sigmoid(h2 @ p["w3"].T + p["b3"].T)


if __name__ == "__main__":
    key = jax.random.PRNGKey(0)
    kx, kp = jax.random.split(key)
    B = 500                        # non-multiple of 128 to exercise padding path
    x = jax.random.normal(kx, (B, 2), dtype=jnp.float32)
    params = init_params(kp)

    out = credit_risk_net(x, params, tb=128)   # grid of 4 pipelined batch tiles
    out = jax.block_until_ready(out)

    ref = reference(x, params)
    assert out.shape == (B, 1)
    assert jnp.allclose(out, ref, atol=1e-5, rtol=1e-5)
    print("KERNEL_OK")
</pallas_src>

<mosaic_0001>
module attributes {stable_mosaic.version = 11 : i64} {
  func.func @credit_risk_kernel(%arg0: i32, %arg1: memref<2x128xf32, #tpu.memory_space<vmem>>, %arg2: memref<8x2xf32, #tpu.memory_space<vmem>>, %arg3: memref<8x1xf32, #tpu.memory_space<vmem>>, %arg4: memref<8x8xf32, #tpu.memory_space<vmem>>, %arg5: memref<8x1xf32, #tpu.memory_space<vmem>>, %arg6: memref<1x8xf32, #tpu.memory_space<vmem>>, %arg7: memref<1x1xf32, #tpu.memory_space<vmem>>, %arg8: memref<1x128xf32, #tpu.memory_space<vmem>>) attributes {dimension_semantics = [#tpu.dimension_semantics<parallel>], iteration_bounds = array<i64: 4>, scalar_prefetch = 0 : i64, scratch_operands = 0 : i64, tpu.core_type = #tpu.core_type<tc>, window_params = [{transform_indices = @transform_0, window_bounds = array<i64: 2, 128>}, {pipeline_mode = #tpu.pipeline_mode<synchronous>, transform_indices = @transform_1, window_bounds = array<i64: 8, 2>}, {pipeline_mode = #tpu.pipeline_mode<synchronous>, transform_indices = @transform_2, window_bounds = array<i64: 8, 1>}, {pipeline_mode = #tpu.pipeline_mode<synchronous>, transform_indices = @transform_3, window_bounds = array<i64: 8, 8>}, {pipeline_mode = #tpu.pipeline_mode<synchronous>, transform_indices = @transform_4, window_bounds = array<i64: 8, 1>}, {pipeline_mode = #tpu.pipeline_mode<synchronous>, transform_indices = @transform_5, window_bounds = array<i64: 1, 8>}, {pipeline_mode = #tpu.pipeline_mode<synchronous>, transform_indices = @transform_6, window_bounds = array<i64: 1, 1>}, {transform_indices = @transform_7, window_bounds = array<i64: 1, 128>}]} {
    %c0 = arith.constant 0 : index
    %c0_0 = arith.constant 0 : index
    %0 = vector.load %arg1[%c0, %c0_0] : memref<2x128xf32, #tpu.memory_space<vmem>>, vector<2x128xf32>
    %c0_1 = arith.constant 0 : index
    %c0_2 = arith.constant 0 : index
    %1 = vector.load %arg2[%c0_1, %c0_2] : memref<8x2xf32, #tpu.memory_space<vmem>>, vector<8x2xf32>
    %c0_3 = arith.constant 0 : index
    %c0_4 = arith.constant 0 : index
    %2 = vector.load %arg3[%c0_3, %c0_4] : memref<8x1xf32, #tpu.memory_space<vmem>>, vector<8x1xf32>
    %3 = vector.shape_cast %2 : vector<8x1xf32> to vector<8x1xf32>
    %4 = vector.broadcast %3 : vector<8x1xf32> to vector<8x128xf32>
    %5 = vector.extract_strided_slice %1 {offsets = [0, 0], sizes = [8, 1], strides = [1, 1]} : vector<8x2xf32> to vector<8x1xf32>
    %6 = vector.extract_strided_slice %0 {offsets = [0, 0], sizes = [1, 128], strides = [1, 1]} : vector<2x128xf32> to vector<1x128xf32>
    %7 = vector.broadcast %5 : vector<8x1xf32> to vector<8x128xf32>
    %8 = vector.broadcast %6 : vector<1x128xf32> to vector<8x128xf32>
    %9 = arith.mulf %7, %8 : vector<8x128xf32>
    %10 = arith.addf %4, %9 : vector<8x128xf32>
    %11 = vector.extract_strided_slice %1 {offsets = [0, 1], sizes = [8, 1], strides = [1, 1]} : vector<8x2xf32> to vector<8x1xf32>
    %12 = vector.extract_strided_slice %0 {offsets = [1, 0], sizes = [1, 128], strides = [1, 1]} : vector<2x128xf32> to vector<1x128xf32>
    %13 = vector.broadcast %11 : vector<8x1xf32> to vector<8x128xf32>
    %14 = vector.broadcast %12 : vector<1x128xf32> to vector<8x128xf32>
    %15 = arith.mulf %13, %14 : vector<8x128xf32>
    %16 = arith.addf %10, %15 : vector<8x128xf32>
    %cst = arith.constant 0.000000e+00 : f32
    %17 = vector.broadcast %cst : f32 to vector<8x128xf32>
    %18 = arith.maximumf %16, %17 : vector<8x128xf32>
    %c0_5 = arith.constant 0 : index
    %c0_6 = arith.constant 0 : index
    %19 = vector.load %arg4[%c0_5, %c0_6] : memref<8x8xf32, #tpu.memory_space<vmem>>, vector<8x8xf32>
    %c0_7 = arith.constant 0 : index
    %c0_8 = arith.constant 0 : index
    %20 = vector.load %arg5[%c0_7, %c0_8] : memref<8x1xf32, #tpu.memory_space<vmem>>, vector<8x1xf32>
    %21 = vector.shape_cast %20 : vector<8x1xf32> to vector<8x1xf32>
    %22 = vector.broadcast %21 : vector<8x1xf32> to vector<8x128xf32>
    %23 = vector.extract_strided_slice %19 {offsets = [0, 0], sizes = [8, 1], strides = [1, 1]} : vector<8x8xf32> to vector<8x1xf32>
    %24 = vector.extract_strided_slice %18 {offsets = [0, 0], sizes = [1, 128], strides = [1, 1]} : vector<8x128xf32> to vector<1x128xf32>
    %25 = vector.broadcast %23 : vector<8x1xf32> to vector<8x128xf32>
    %26 = vector.broadcast %24 : vector<1x128xf32> to vector<8x128xf32>
    %27 = arith.mulf %25, %26 : vector<8x128xf32>
    %28 = arith.addf %22, %27 : vector<8x128xf32>
    %29 = vector.extract_strided_slice %19 {offsets = [0, 1], sizes = [8, 1], strides = [1, 1]} : vector<8x8xf32> to vector<8x1xf32>
    %30 = vector.extract_strided_slice %18 {offsets = [1, 0], sizes = [1, 128], strides = [1, 1]} : vector<8x128xf32> to vector<1x128xf32>
    %31 = vector.broadcast %29 : vector<8x1xf32> to vector<8x128xf32>
    %32 = vector.broadcast %30 : vector<1x128xf32> to vector<8x128xf32>
    %33 = arith.mulf %31, %32 : vector<8x128xf32>
    %34 = arith.addf %28, %33 : vector<8x128xf32>
    %35 = vector.extract_strided_slice %19 {offsets = [0, 2], sizes = [8, 1], strides = [1, 1]} : vector<8x8xf32> to vector<8x1xf32>
    %36 = vector.extract_strided_slice %18 {offsets = [2, 0], sizes = [1, 128], strides = [1, 1]} : vector<8x128xf32> to vector<1x128xf32>
    %37 = vector.broadcast %35 : vector<8x1xf32> to vector<8x128xf32>
    %38 = vector.broadcast %36 : vector<1x128xf32> to vector<8x128xf32>
    %39 = arith.mulf %37, %38 : vector<8x128xf32>
    %40 = arith.addf %34, %39 : vector<8x128xf32>
    %41 = vector.extract_strided_slice %19 {offsets = [0, 3], sizes = [8, 1], strides = [1, 1]} : vector<8x8xf32> to vector<8x1xf32>
    %42 = vector.extract_strided_slice %18 {offsets = [3, 0], sizes = [1, 128], strides = [1, 1]} : vector<8x128xf32> to vector<1x128xf32>
    %43 = vector.broadcast %41 : vector<8x1xf32> to vector<8x128xf32>
    %44 = vector.broadcast %42 : vector<1x128xf32> to vector<8x128xf32>
    %45 = arith.mulf %43, %44 : vector<8x128xf32>
    %46 = arith.addf %40, %45 : vector<8x128xf32>
    %47 = vector.extract_strided_slice %19 {offsets = [0, 4], sizes = [8, 1], strides = [1, 1]} : vector<8x8xf32> to vector<8x1xf32>
    %48 = vector.extract_strided_slice %18 {offsets = [4, 0], sizes = [1, 128], strides = [1, 1]} : vector<8x128xf32> to vector<1x128xf32>
    %49 = vector.broadcast %47 : vector<8x1xf32> to vector<8x128xf32>
    %50 = vector.broadcast %48 : vector<1x128xf32> to vector<8x128xf32>
    %51 = arith.mulf %49, %50 : vector<8x128xf32>
    %52 = arith.addf %46, %51 : vector<8x128xf32>
    %53 = vector.extract_strided_slice %19 {offsets = [0, 5], sizes = [8, 1], strides = [1, 1]} : vector<8x8xf32> to vector<8x1xf32>
    %54 = vector.extract_strided_slice %18 {offsets = [5, 0], sizes = [1, 128], strides = [1, 1]} : vector<8x128xf32> to vector<1x128xf32>
    %55 = vector.broadcast %53 : vector<8x1xf32> to vector<8x128xf32>
    %56 = vector.broadcast %54 : vector<1x128xf32> to vector<8x128xf32>
    %57 = arith.mulf %55, %56 : vector<8x128xf32>
    %58 = arith.addf %52, %57 : vector<8x128xf32>
    %59 = vector.extract_strided_slice %19 {offsets = [0, 6], sizes = [8, 1], strides = [1, 1]} : vector<8x8xf32> to vector<8x1xf32>
    %60 = vector.extract_strided_slice %18 {offsets = [6, 0], sizes = [1, 128], strides = [1, 1]} : vector<8x128xf32> to vector<1x128xf32>
    %61 = vector.broadcast %59 : vector<8x1xf32> to vector<8x128xf32>
    %62 = vector.broadcast %60 : vector<1x128xf32> to vector<8x128xf32>
    %63 = arith.mulf %61, %62 : vector<8x128xf32>
    %64 = arith.addf %58, %63 : vector<8x128xf32>
    %65 = vector.extract_strided_slice %19 {offsets = [0, 7], sizes = [8, 1], strides = [1, 1]} : vector<8x8xf32> to vector<8x1xf32>
    %66 = vector.extract_strided_slice %18 {offsets = [7, 0], sizes = [1, 128], strides = [1, 1]} : vector<8x128xf32> to vector<1x128xf32>
    %67 = vector.broadcast %65 : vector<8x1xf32> to vector<8x128xf32>
    %68 = vector.broadcast %66 : vector<1x128xf32> to vector<8x128xf32>
    %69 = arith.mulf %67, %68 : vector<8x128xf32>
    %70 = arith.addf %64, %69 : vector<8x128xf32>
    %cst_9 = arith.constant 0.000000e+00 : f32
    %71 = vector.broadcast %cst_9 : f32 to vector<8x128xf32>
    %72 = arith.maximumf %70, %71 : vector<8x128xf32>
    %c0_10 = arith.constant 0 : index
    %c0_11 = arith.constant 0 : index
    %73 = vector.load %arg6[%c0_10, %c0_11] : memref<1x8xf32, #tpu.memory_space<vmem>>, vector<1x8xf32>
    %c0_12 = arith.constant 0 : index
    %c0_13 = arith.constant 0 : index
    %74 = vector.load %arg7[%c0_12, %c0_13] : memref<1x1xf32, #tpu.memory_space<vmem>>, vector<1x1xf32>
    %75 = vector.shape_cast %74 : vector<1x1xf32> to vector<1x1xf32>
    %76 = vector.broadcast %75 : vector<1x1xf32> to vector<1x128xf32>
    %77 = vector.extract_strided_slice %73 {offsets = [0, 0], sizes = [1, 1], strides = [1, 1]} : vector<1x8xf32> to vector<1x1xf32>
    %78 = vector.extract_strided_slice %72 {offsets = [0, 0], sizes = [1, 128], strides = [1, 1]} : vector<8x128xf32> to vector<1x128xf32>
    %79 = vector.broadcast %77 : vector<1x1xf32> to vector<1x128xf32>
    %80 = arith.mulf %79, %78 : vector<1x128xf32>
    %81 = arith.addf %76, %80 : vector<1x128xf32>
    %82 = vector.extract_strided_slice %73 {offsets = [0, 1], sizes = [1, 1], strides = [1, 1]} : vector<1x8xf32> to vector<1x1xf32>
    %83 = vector.extract_strided_slice %72 {offsets = [1, 0], sizes = [1, 128], strides = [1, 1]} : vector<8x128xf32> to vector<1x128xf32>
    %84 = vector.broadcast %82 : vector<1x1xf32> to vector<1x128xf32>
    %85 = arith.mulf %84, %83 : vector<1x128xf32>
    %86 = arith.addf %81, %85 : vector<1x128xf32>
    %87 = vector.extract_strided_slice %73 {offsets = [0, 2], sizes = [1, 1], strides = [1, 1]} : vector<1x8xf32> to vector<1x1xf32>
    %88 = vector.extract_strided_slice %72 {offsets = [2, 0], sizes = [1, 128], strides = [1, 1]} : vector<8x128xf32> to vector<1x128xf32>
    %89 = vector.broadcast %87 : vector<1x1xf32> to vector<1x128xf32>
    %90 = arith.mulf %89, %88 : vector<1x128xf32>
    %91 = arith.addf %86, %90 : vector<1x128xf32>
    %92 = vector.extract_strided_slice %73 {offsets = [0, 3], sizes = [1, 1], strides = [1, 1]} : vector<1x8xf32> to vector<1x1xf32>
    %93 = vector.extract_strided_slice %72 {offsets = [3, 0], sizes = [1, 128], strides = [1, 1]} : vector<8x128xf32> to vector<1x128xf32>
    %94 = vector.broadcast %92 : vector<1x1xf32> to vector<1x128xf32>
    %95 = arith.mulf %94, %93 : vector<1x128xf32>
    %96 = arith.addf %91, %95 : vector<1x128xf32>
    %97 = vector.extract_strided_slice %73 {offsets = [0, 4], sizes = [1, 1], strides = [1, 1]} : vector<1x8xf32> to vector<1x1xf32>
    %98 = vector.extract_strided_slice %72 {offsets = [4, 0], sizes = [1, 128], strides = [1, 1]} : vector<8x128xf32> to vector<1x128xf32>
    %99 = vector.broadcast %97 : vector<1x1xf32> to vector<1x128xf32>
    %100 = arith.mulf %99, %98 : vector<1x128xf32>
    %101 = arith.addf %96, %100 : vector<1x128xf32>
    %102 = vector.extract_strided_slice %73 {offsets = [0, 5], sizes = [1, 1], strides = [1, 1]} : vector<1x8xf32> to vector<1x1xf32>
    %103 = vector.extract_strided_slice %72 {offsets = [5, 0], sizes = [1, 128], strides = [1, 1]} : vector<8x128xf32> to vector<1x128xf32>
    %104 = vector.broadcast %102 : vector<1x1xf32> to vector<1x128xf32>
    %105 = arith.mulf %104, %103 : vector<1x128xf32>
    %106 = arith.addf %101, %105 : vector<1x128xf32>
    %107 = vector.extract_strided_slice %73 {offsets = [0, 6], sizes = [1, 1], strides = [1, 1]} : vector<1x8xf32> to vector<1x1xf32>
    %108 = vector.extract_strided_slice %72 {offsets = [6, 0], sizes = [1, 128], strides = [1, 1]} : vector<8x128xf32> to vector<1x128xf32>
    %109 = vector.broadcast %107 : vector<1x1xf32> to vector<1x128xf32>
    %110 = arith.mulf %109, %108 : vector<1x128xf32>
    %111 = arith.addf %106, %110 : vector<1x128xf32>
    %112 = vector.extract_strided_slice %73 {offsets = [0, 7], sizes = [1, 1], strides = [1, 1]} : vector<1x8xf32> to vector<1x1xf32>
    %113 = vector.extract_strided_slice %72 {offsets = [7, 0], sizes = [1, 128], strides = [1, 1]} : vector<8x128xf32> to vector<1x128xf32>
    %114 = vector.broadcast %112 : vector<1x1xf32> to vector<1x128xf32>
    %115 = arith.mulf %114, %113 : vector<1x128xf32>
    %116 = arith.addf %111, %115 : vector<1x128xf32>
    %cst_14 = arith.constant 0.000000e+00 : f32
    %117 = vector.broadcast %cst_14 : f32 to vector<1x128xf32>
    %118 = arith.subf %117, %116 : vector<1x128xf32>
    %119 = math.exp %118 : vector<1x128xf32>
    %cst_15 = arith.constant 1.000000e+00 : f32
    %120 = vector.broadcast %cst_15 : f32 to vector<1x128xf32>
    %121 = arith.addf %120, %119 : vector<1x128xf32>
    %cst_16 = arith.constant 1.000000e+00 : f32
    %122 = vector.broadcast %cst_16 : f32 to vector<1x128xf32>
    %123 = arith.divf %122, %121 : vector<1x128xf32>
    %c0_17 = arith.constant 0 : index
    %c0_18 = arith.constant 0 : index
    %124 = vector.load %arg8[%c0_17, %c0_18] : memref<1x128xf32, #tpu.memory_space<vmem>>, vector<1x128xf32>
    tpu.vector_store %arg8[%c0_17, %c0_18], %123 {strides = array<i32>} : memref<1x128xf32, #tpu.memory_space<vmem>>, vector<1x128xf32>,
    return
  }
  func.func @transform_0(%arg0: i32) -> (i32, i32) {
    %c0_i32 = arith.constant 0 : i32
    %c0_i32_0 = arith.constant 0 : i32
    return %c0_i32, %arg0 : i32, i32
  }
  func.func @transform_1(%arg0: i32) -> (i32, i32) {
    %c0_i32 = arith.constant 0 : i32
    %c0_i32_0 = arith.constant 0 : i32
    %c0_i32_1 = arith.constant 0 : i32
    return %c0_i32, %c0_i32_0 : i32, i32
  }
  func.func @transform_2(%arg0: i32) -> (i32, i32) {
    %c0_i32 = arith.constant 0 : i32
    %c0_i32_0 = arith.constant 0 : i32
    %c0_i32_1 = arith.constant 0 : i32
    return %c0_i32, %c0_i32_0 : i32, i32
  }
  func.func @transform_3(%arg0: i32) -> (i32, i32) {
    %c0_i32 = arith.constant 0 : i32
    %c0_i32_0 = arith.constant 0 : i32
    %c0_i32_1 = arith.constant 0 : i32
    return %c0_i32, %c0_i32_0 : i32, i32
  }
  func.func @transform_4(%arg0: i32) -> (i32, i32) {
    %c0_i32 = arith.constant 0 : i32
    %c0_i32_0 = arith.constant 0 : i32
    %c0_i32_1 = arith.constant 0 : i32
    return %c0_i32, %c0_i32_0 : i32, i32
  }
  func.func @transform_5(%arg0: i32) -> (i32, i32) {
    %c0_i32 = arith.constant 0 : i32
    %c0_i32_0 = arith.constant 0 : i32
    %c0_i32_1 = arith.constant 0 : i32
    return %c0_i32, %c0_i32_0 : i32, i32
  }
  func.func @transform_6(%arg0: i32) -> (i32, i32) {
    %c0_i32 = arith.constant 0 : i32
    %c0_i32_0 = arith.constant 0 : i32
    %c0_i32_1 = arith.constant 0 : i32
    return %c0_i32, %c0_i32_0 : i32, i32
  }
  func.func @transform_7(%arg0: i32) -> (i32, i32) {
    %c0_i32 = arith.constant 0 : i32
    %c0_i32_0 = arith.constant 0 : i32
    return %c0_i32, %arg0 : i32, i32
  }
}

</mosaic_0001>

<llo_original>
// kernel: tpu_custom_call.1
$region0: #{tpu_custom_call.1}
  #allocation0 [shape = 'u32[]', space=smem, size = 0x4, offset = 0x4, fixed_abs, tag = 'smem constant byte address 0x4 - core index']
  #allocation1 [shape = 'u32[144,128]{1,0:T(1,128)}', space=vmem, size = 0x12000, scoped, tag = 'internal scratch']
  #allocation2 [shape = 'f32[1,1]{1,0:T(1,128)S(1)}', space=vmem, size = 0x200, scoped, tag = 'scoped memory for tpu_custom_call.1']
  %s0 = inlined_call_operand.vmem [shape: f32[2,512], index: 0, kind: input, shape index: {}]
  %s1 = inlined_call_operand.vmem [shape: f32[8,2], index: 1, kind: input, shape index: {}]
  %s2 = inlined_call_operand.vmem [shape: f32[8,1], index: 2, kind: input, shape index: {}]
  %s3 = inlined_call_operand.vmem [shape: f32[8,8], index: 3, kind: input, shape index: {}]
  %s4 = inlined_call_operand.vmem [shape: f32[8,1], index: 4, kind: input, shape index: {}]
  %s5 = inlined_call_operand.vmem [shape: f32[1,8], index: 5, kind: input, shape index: {}]
  %s6 = inlined_call_operand.<no memory space> [shape: f32[1,1], index: 6, kind: input, shape index: {}]
  %s7 = inlined_call_operand.hbm [shape: f32[1,512], index: 7, kind: output, shape index: {}]
  %s8 = sld [smem:[#allocation0]]
  $region61: #{tpu_custom_call.1} parent=0
    _
  %s10 = ssub.s32 1, %s8
  %s11 = scalar_select 0, %s10, %s8
  %v12 = vstv %s6
  %13 = vst [vmem:[#allocation2] sm:$0x1] %v12
  $region1: #{tpu_custom_call.1} parent=0
    #allocation3 [shape = 'u8[1024]{0}', space=vmem, size = 0x400, scoped, tag = 'output window, operand 0']
    #allocation4 [shape = 's32[2]{0}', space=sflag, size = 0x8, scoped, tag = 'scoped memory for tpu_custom_call.1']
    %14 = vsyncpa [#allocation4], 0
    %s15 = scalar_lea.sflag [#allocation4], 1
    %16 = vsyncpa %s15, 0
    loop: start=0, step=1, limit=6
    $region2: #{tpu_custom_call.1} parent=1 // loop_pre_header
      _
    $region3: #{tpu_custom_call.1} parent=1 // loop_header
      %s18 = sphi 0, %s22
      %p19 = scmp.ge.s32.totalorder %s18, 6
      %s28 = sphi 0, %s30
      %s31 = sphi 0, %s28
      %s32 = sphi 0, %s31
      %s48 = sphi 0, %s32
      %s52 = sphi 0, %s52
      %s54 = sphi 0, %s52
      %s55 = sphi 0, %s54
      %s69 = sphi 0, %s55
      %s73 = sphi 0, %s73
      %s75 = sphi 0, %s73
      %s76 = sphi 0, %s75
      %s90 = sphi 0, %s76
      %s94 = sphi 0, %s94
      %s96 = sphi 0, %s94
      %s97 = sphi 0, %s96
      %s111 = sphi 0, %s97
      %s115 = sphi 0, %s115
      %s117 = sphi 0, %s115
      %s118 = sphi 0, %s117
      %s132 = sphi 0, %s118
      %s136 = sphi 0, %s136
      %s138 = sphi 0, %s136
      %s139 = sphi 0, %s138
      %s153 = sphi 0, %s139
      %s157 = sphi 0, %s157
      %s159 = sphi 0, %s157
      %s160 = sphi 0, %s159
      %s174 = sphi 0, %s160
      %s180 = sphi 0, %s182
      %s183 = sphi 0, %s180
      %s184 = sphi 0, %s183
      %s200 = sphi 0, %s184
    $region4: #{tpu_custom_call.1} parent=1 // loop_header_branch
      %21 = sbr.rel (%p19) target = $region8
    $region5: #{tpu_custom_call.1} parent=1 // loop_body
      %s23 = ssub.s32 %s18, 1
      %s24 = ssub.s32 %s18, 2
      %s25 = sadd.s32 %s18, 1
      %s26 = ssub.s32 %s18, %s25
      %p27 = scmp.eq.s32.totalorder %s26, 0
      %s29 = sadd.s32 %s28, 1
      %s30 = scalar_select %p27, %s28, %s29
      %p33 = pneg %p27
      %p34 = scmp.eq.s32.totalorder %s18, 3
      %p35 = por %p33, %p34
      %p36 = scmp.ne.s32.totalorder %s28, %s31
      %p37 = scmp.eq.s32.totalorder %s18, 0
      %p38 = por %p36, %p37
      %p39 = scmp.ne.s32.totalorder %s28, %s31
      %p40 = scmp.eq.s32.totalorder %s23, 3
      %p41 = por %p39, %p40
      %p42 = scmp.ne.s32.totalorder %s31, %s32
      %p43 = scmp.eq.s32.totalorder %s23, 0
      %p44 = por %p42, %p43
      %p45 = scmp.ne.s32.totalorder %s31, %s32
      %p46 = scmp.eq.s32.totalorder %s24, 3
      %p47 = por %p45, %p46
      %p49 = scmp.ne.s32.totalorder %s32, %s48
      %p50 = scmp.eq.s32.totalorder %s24, 0
      %p51 = por %p49, %p50
      %s53 = sadd.s32 %s52, 1
      %p56 = scmp.eq.s32.totalorder %s18, 3
      %p57 = scmp.ne.s32.totalorder %s52, %s54
      %p58 = scmp.eq.s32.totalorder %s18, 0
      %p59 = por %p57, %p58
      %p60 = scmp.ne.s32.totalorder %s52, %s54
      %p61 = scmp.eq.s32.totalorder %s23, 3
      %p62 = por %p60, %p61
      %p63 = scmp.ne.s32.totalorder %s54, %s55
      %p64 = scmp.eq.s32.totalorder %s23, 0
      %p65 = por %p63, %p64
      %p66 = scmp.ne.s32.totalorder %s54, %s55
      %p67 = scmp.eq.s32.totalorder %s24, 3
      %p68 = por %p66, %p67
      %p70 = scmp.ne.s32.totalorder %s55, %s69
      %p71 = scmp.eq.s32.totalorder %s24, 0
      %p72 = por %p70, %p71
      %s74 = sadd.s32 %s73, 1
      %p77 = scmp.eq.s32.totalorder %s18, 3
      %p78 = scmp.ne.s32.totalorder %s73, %s75
      %p79 = scmp.eq.s32.totalorder %s18, 0
      %p80 = por %p78, %p79
      %p81 = scmp.ne.s32.totalorder %s73, %s75
      %p82 = scmp.eq.s32.totalorder %s23, 3
      %p83 = por %p81, %p82
      %p84 = scmp.ne.s32.totalorder %s75, %s76
      %p85 = scmp.eq.s32.totalorder %s23, 0
      %p86 = por %p84, %p85
      %p87 = scmp.ne.s32.totalorder %s75, %s76
      %p88 = scmp.eq.s32.totalorder %s24, 3
      %p89 = por %p87, %p88
      %p91 = scmp.ne.s32.totalorder %s76, %s90
      %p92 = scmp.eq.s32.totalorder %s24, 0
      %p93 = por %p91, %p92
      %s95 = sadd.s32 %s94, 1
      %p98 = scmp.eq.s32.totalorder %s18, 3
      %p99 = scmp.ne.s32.totalorder %s94, %s96
      %p100 = scmp.eq.s32.totalorder %s18, 0
      %p101 = por %p99, %p100
      %p102 = scmp.ne.s32.totalorder %s94, %s96
      %p103 = scmp.eq.s32.totalorder %s23, 3
      %p104 = por %p102, %p103
      %p105 = scmp.ne.s32.totalorder %s96, %s97
      %p106 = scmp.eq.s32.totalorder %s23, 0
      %p107 = por %p105, %p106
      %p108 = scmp.ne.s32.totalorder %s96, %s97
      %p109 = scmp.eq.s32.totalorder %s24, 3
      %p110 = por %p108, %p109
      %p112 = scmp.ne.s32.totalorder %s97, %s111
      %p113 = scmp.eq.s32.totalorder %s24, 0
      %p114 = por %p112, %p113
      %s116 = sadd.s32 %s115, 1
      %p119 = scmp.eq.s32.totalorder %s18, 3
      %p120 = scmp.ne.s32.totalorder %s115, %s117
      %p121 = scmp.eq.s32.totalorder %s18, 0
      %p122 = por %p120, %p121
      %p123 = scmp.ne.s32.totalorder %s115, %s117
      %p124 = scmp.eq.s32.totalorder %s23, 3
      %p125 = por %p123, %p124
      %p126 = scmp.ne.s32.totalorder %s117, %s118
      %p127 = scmp.eq.s32.totalorder %s23, 0
      %p128 = por %p126, %p127
      %p129 = scmp.ne.s32.totalorder %s117, %s118
      %p130 = scmp.eq.s32.totalorder %s24, 3
      %p131 = por %p129, %p130
      %p133 = scmp.ne.s32.totalorder %s118, %s132
      %p134 = scmp.eq.s32.totalorder %s24, 0
      %p135 = por %p133, %p134
      %s137 = sadd.s32 %s136, 1
      %p140 = scmp.eq.s32.totalorder %s18, 3
      %p141 = scmp.ne.s32.totalorder %s136, %s138
      %p142 = scmp.eq.s32.totalorder %s18, 0
      %p143 = por %p141, %p142
      %p144 = scmp.ne.s32.totalorder %s136, %s138
      %p145 = scmp.eq.s32.totalorder %s23, 3
      %p146 = por %p144, %p145
      %p147 = scmp.ne.s32.totalorder %s138, %s139
      %p148 = scmp.eq.s32.totalorder %s23, 0
      %p149 = por %p147, %p148
      %p150 = scmp.ne.s32.totalorder %s138, %s139
      %p151 = scmp.eq.s32.totalorder %s24, 3
      %p152 = por %p150, %p151
      %p154 = scmp.ne.s32.totalorder %s139, %s153
      %p155 = scmp.eq.s32.totalorder %s24, 0
      %p156 = por %p154, %p155
      %s158 = sadd.s32 %s157, 1
      %p161 = scmp.eq.s32.totalorder %s18, 3
      %p162 = scmp.ne.s32.totalorder %s157, %s159
      %p163 = scmp.eq.s32.totalorder %s18, 0
      %p164 = por %p162, %p163
      %p165 = scmp.ne.s32.totalorder %s157, %s159
      %p166 = scmp.eq.s32.totalorder %s23, 3
      %p167 = por %p165, %p166
      %p168 = scmp.ne.s32.totalorder %s159, %s160
      %p169 = scmp.eq.s32.totalorder %s23, 0
      %p170 = por %p168, %p169
      %p171 = scmp.ne.s32.totalorder %s159, %s160
      %p172 = scmp.eq.s32.totalorder %s24, 3
      %p173 = por %p171, %p172
      %p175 = scmp.ne.s32.totalorder %s160, %s174
      %p176 = scmp.eq.s32.totalorder %s24, 0
      %p177 = por %p175, %p176
      %s178 = ssub.s32 %s18, %s25
      %p179 = scmp.eq.s32.totalorder %s178, 0
      %s181 = sadd.s32 %s180, 1
      %s182 = scalar_select %p179, %s180, %s181
      %p185 = pneg %p179
      %p186 = scmp.eq.s32.totalorder %s18, 3
      %p187 = por %p185, %p186
      %p188 = scmp.ne.s32.totalorder %s180, %s183
      %p189 = scmp.eq.s32.totalorder %s18, 0
      %p190 = por %p188, %p189
      %p191 = scmp.ne.s32.totalorder %s180, %s183
      %p192 = scmp.eq.s32.totalorder %s23, 3
      %p193 = por %p191, %p192
      %p194 = scmp.ne.s32.totalorder %s183, %s184
      %p195 = scmp.eq.s32.totalorder %s23, 0
      %p196 = por %p194, %p195
      %p197 = scmp.ne.s32.totalorder %s183, %s184
      %p198 = scmp.eq.s32.totalorder %s24, 3
      %p199 = por %p197, %p198
      %p201 = scmp.ne.s32.totalorder %s184, %s200
      %p202 = scmp.eq.s32.totalorder %s24, 0
      %p203 = por %p201, %p202
      %p204 = scmp.le.s32.totalorder 1, %s18
      %p205 = scmp.lt.s32.totalorder %s18, 5
      %p206 = pnand %p204, %p205
      %p207 = pneg %p206
      // Predicated region
      $region9: #{tpu_custom_call.1} parent=5 // pred_check
        _
      $region10: #{tpu_custom_call.1} parent=5 // pred_check_branch
        %209 = sbr.rel (%p206) target = $region12
      $region11: #{tpu_custom_call.1} parent=5 // pred_region
        %s210 = ssub.s32 %s18, 1
        // Predicated region
        $region13: #{tpu_custom_call.1} parent=11 // pred_check
          %p211 = pneg %p65
        $region14: #{tpu_custom_call.1} parent=11 // pred_check_branch
          %213 = sbr.rel (%p211) target = $region16
        $region15: #{tpu_custom_call.1} parent=11 // pred_region
          _
        $region16: #{tpu_custom_call.1} parent=11 // pred_fallthru
          _
        // Predicated region
        $region17: #{tpu_custom_call.1} parent=11 // pred_check
          %p214 = pneg %p86
        $region18: #{tpu_custom_call.1} parent=11 // pred_check_branch
          %216 = sbr.rel (%p214) target = $region20
        $region19: #{tpu_custom_call.1} parent=11 // pred_region
          _
        $region20: #{tpu_custom_call.1} parent=11 // pred_fallthru
          _
        // Predicated region
        $region21: #{tpu_custom_call.1} parent=11 // pred_check
          %p217 = pneg %p107
        $region22: #{tpu_custom_call.1} parent=11 // pred_check_branch
          %219 = sbr.rel (%p217) target = $region24
        $region23: #{tpu_custom_call.1} parent=11 // pred_region
          _
        $region24: #{tpu_custom_call.1} parent=11 // pred_fallthru
          _
        // Predicated region
        $region25: #{tpu_custom_call.1} parent=11 // pred_check
          %p220 = pneg %p128
        $region26: #{tpu_custom_call.1} parent=11 // pred_check_branch
          %222 = sbr.rel (%p220) target = $region28
        $region27: #{tpu_custom_call.1} parent=11 // pred_region
          _
        $region28: #{tpu_custom_call.1} parent=11 // pred_fallthru
          _
        // Predicated region
        $region29: #{tpu_custom_call.1} parent=11 // pred_check
          %p223 = pneg %p149
        $region30: #{tpu_custom_call.1} parent=11 // pred_check_branch
          %225 = sbr.rel (%p223) target = $region32
        $region31: #{tpu_custom_call.1} parent=11 // pred_region
          _
        $region32: #{tpu_custom_call.1} parent=11 // pred_fallthru
          _
        // Predicated region
        $region33: #{tpu_custom_call.1} parent=11 // pred_check
          %p226 = pneg %p170
        $region34: #{tpu_custom_call.1} parent=11 // pred_check_branch
          %228 = sbr.rel (%p226) target = $region36
        $region35: #{tpu_custom_call.1} parent=11 // pred_region
          _
        $region36: #{tpu_custom_call.1} parent=11 // pred_fallthru
          _
      $region12: #{tpu_custom_call.1} parent=5 // pred_fallthru
        _
      %p229 = scmp.lt.s32.totalorder %s18, 4
      // Predicated region
      $region37: #{tpu_custom_call.1} parent=5 // pred_check
        %p230 = pneg %p229
      $region38: #{tpu_custom_call.1} parent=5 // pred_check_branch
        %232 = sbr.rel (%p230) target = $region40
      $region39: #{tpu_custom_call.1} parent=5 // pred_region
        // Predicated region
        $region41: #{tpu_custom_call.1} parent=39 // pred_check
          %p233 = pneg %p38
        $region42: #{tpu_custom_call.1} parent=39 // pred_check_branch
          %235 = sbr.rel (%p233) target = $region44
        $region43: #{tpu_custom_call.1} parent=39 // pred_region
          %p236 = scmp.lt.s32.totalorder %s18, 3
          %s237 = scalar_select %p236, %s18, 3
          %s238 = smul.addr %s237, 2
          %s239 = scalar_lea.vmem %s0, %s238
        $region44: #{tpu_custom_call.1} parent=39 // pred_fallthru
          _
      $region40: #{tpu_custom_call.1} parent=5 // pred_fallthru
        _
      %p240 = scmp.le.s32.totalorder 1, %s18
      %p241 = scmp.lt.s32.totalorder %s18, 5
      %p242 = pnand %p240, %p241
      %p243 = pneg %p242
      // Predicated region
      $region45: #{tpu_custom_call.1} parent=5 // pred_check
        _
      $region46: #{tpu_custom_call.1} parent=5 // pred_check_branch
        %245 = sbr.rel (%p242) target = $region48
      $region47: #{tpu_custom_call.1} parent=5 // pred_region
        %s246 = ssub.s32 %s18, 1
        %p247 = scmp.lt.s32.totalorder %s23, 3
        %s248 = scalar_select %p247, %s23, 3
        %s249 = smul.addr %s248, 2
        %s250 = scalar_lea.vmem %s0, %s249
        %p251 = pneg %p44
        %p252 = pneg %p41
        %p253 = pneg %p65
        %p254 = pneg %p62
        %p255 = pneg %p86
        %p256 = pneg %p83
        %p257 = pneg %p107
        %p258 = pneg %p104
        %p259 = pneg %p128
        %p260 = pneg %p125
        %p261 = pneg %p149
        %p262 = pneg %p146
        %p263 = pneg %p170
        %p264 = pneg %p167
        %p265 = pneg %p196
        %p266 = pneg %p193
        %s267 = sand.u32 %s183, 1
        %s268 = scalar_lea.sflag [#allocation4], %s267
        %s269 = sand.u32 %s183, 1
        %s270 = scalar_lea.vmem [#allocation3], %s269
        %p271 = scmp.lt.s32.totalorder %s23, 3
        %s272 = scalar_select %p271, %s23, 3
        %s273 = smul.addr %s272, 2
        %s274 = scalar_lea.vmem %s0, %s273
        %v275 = vld [vmem:[%s274] sm:$0x3]
        %v276 = vld [vmem:[%s1] sm:$0xff]
        %v277 = vld [vmem:[%s2] sm:$0xff]
        %279 = vset.pattern.permute.xlu0 0
        %280 = vperm.xlu0 %279, %v277
        %v281 = vpop.permute.xlu0 %280
        %284 = vset.pattern.permute.xlu0 0
        %285 = vperm.xlu0 %284, %v276
        %v286 = vpop.permute.xlu0 %285
        %v288 = vlaneseq
        %v289 = vshrl.u32 %v288, 7
        %v290 = vsub.s32 0, %v289
        %v291 = vrot.slane %v275, %v290
        %v292 = vmul.f32 %v286, %v291
        %v293 = vadd.f32 %v281, %v292
        %294 = vset.pattern.permute.xlu0 1
        %295 = vperm.xlu0 %294, %v276
        %v296 = vpop.permute.xlu0 %295
        %v298 = vlaneseq
        %v299 = vshrl.u32 %v298, 7
        %v300 = vsub.s32 1, %v299
        %v301 = vrot.slane %v275, %v300
        %v302 = vmul.f32 %v296, %v301
        %v303 = vadd.f32 %v293, %v302
        %v304 = vmax.f32 %v303, 0.0
        %v305 = vld [vmem:[%s3] sm:$0xff]
        %v306 = vld [vmem:[%s4] sm:$0xff]
        %308 = vset.pattern.permute.xlu0 0
        %309 = vperm.xlu0 %308, %v306
        %v310 = vpop.permute.xlu0 %309
        %313 = vset.pattern.permute.xlu0 0
        %314 = vperm.xlu0 %313, %v305
        %v315 = vpop.permute.xlu0 %314
        %v317 = vlaneseq
        %v318 = vshrl.u32 %v317, 7
        %v319 = vsub.s32 0, %v318
        %v320 = vrot.slane %v304, %v319
        %v321 = vmul.f32 %v315, %v320
        %v322 = vadd.f32 %v310, %v321
        %323 = vset.pattern.permute.xlu0 1
        %324 = vperm.xlu0 %323, %v305
        %v325 = vpop.permute.xlu0 %324
        %v327 = vlaneseq
        %v328 = vshrl.u32 %v327, 7
        %v329 = vsub.s32 1, %v328
        %v330 = vrot.slane %v304, %v329
        %v331 = vmul.f32 %v325, %v330
        %v332 = vadd.f32 %v322, %v331
        %333 = vset.pattern.permute.xlu0 2
        %334 = vperm.xlu0 %333, %v305
        %v335 = vpop.permute.xlu0 %334
        %v337 = vlaneseq
        %v338 = vshrl.u32 %v337, 7
        %v339 = vsub.s32 2, %v338
        %v340 = vrot.slane %v304, %v339
        %v341 = vmul.f32 %v335, %v340
        %v342 = vadd.f32 %v332, %v341
        %343 = vset.pattern.permute.xlu0 3
        %344 = vperm.xlu0 %343, %v305
        %v345 = vpop.permute.xlu0 %344
        %v347 = vlaneseq
        %v348 = vshrl.u32 %v347, 7
        %v349 = vsub.s32 3, %v348
        %v350 = vrot.slane %v304, %v349
        %v351 = vmul.f32 %v345, %v350
        %v352 = vadd.f32 %v342, %v351
        %353 = vset.pattern.permute.xlu0 4
        %354 = vperm.xlu0 %353, %v305
        %v355 = vpop.permute.xlu0 %354
        %v357 = vlaneseq
        %v358 = vshrl.u32 %v357, 7
        %v359 = vsub.s32 4, %v358
        %v360 = vrot.slane %v304, %v359
        %v361 = vmul.f32 %v355, %v360
        %v362 = vadd.f32 %v352, %v361
        %363 = vset.pattern.permute.xlu0 5
        %364 = vperm.xlu0 %363, %v305
        %v365 = vpop.permute.xlu0 %364
        %v367 = vlaneseq
        %v368 = vshrl.u32 %v367, 7
        %v369 = vsub.s32 5, %v368
        %v370 = vrot.slane %v304, %v369
        %v371 = vmul.f32 %v365, %v370
        %v372 = vadd.f32 %v362, %v371
        %373 = vset.pattern.permute.xlu0 6
        %374 = vperm.xlu0 %373, %v305
        %v375 = vpop.permute.xlu0 %374
        %v377 = vlaneseq
        %v378 = vshrl.u32 %v377, 7
        %v379 = vsub.s32 6, %v378
        %v380 = vrot.slane %v304, %v379
        %v381 = vmul.f32 %v375, %v380
        %v382 = vadd.f32 %v372, %v381
        %383 = vset.pattern.permute.xlu0 7
        %384 = vperm.xlu0 %383, %v305
        %v385 = vpop.permute.xlu0 %384
        %v387 = vlaneseq
        %v388 = vshrl.u32 %v387, 7
        %v389 = vsub.s32 7, %v388
        %v390 = vrot.slane %v304, %v389
        %v391 = vmul.f32 %v385, %v390
        %v392 = vadd.f32 %v382, %v391
        %v393 = vmax.f32 %v392, 0.0
        %v394 = vld [vmem:[%s5] sm:$0x1]
        %v395 = vld [vmem:[#allocation2] sm:$0x1]
        %397 = vset.pattern.permute.xlu0 0
        %398 = vperm.xlu0 %397, %v395
        %v399 = vpop.permute.xlu0 %398
        %v401 = vlaneseq
        %v402 = vshrl.u32 %v401, 7
        %v403 = vsub.s32 0, %v402
        %v404 = vrot.slane %v399, %v403
        %406 = vset.pattern.permute.xlu0 0
        %407 = vperm.xlu0 %406, %v394
        %v408 = vpop.permute.xlu0 %407
        %v410 = vlaneseq
        %v411 = vshrl.u32 %v410, 7
        %v412 = vsub.s32 0, %v411
        %v413 = vrot.slane %v408, %v412
        %v414 = vmul.f32 %v413, %v393
        %v415 = vadd.f32 %v404, %v414
        %416 = vset.pattern.permute.xlu0 1
        %417 = vperm.xlu0 %416, %v394
        %v418 = vpop.permute.xlu0 %417
        %v420 = vlaneseq
        %v421 = vshrl.u32 %v420, 7
        %v422 = vsub.s32 0, %v421
        %v423 = vrot.slane %v418, %v422
        %v424 = vmul.f32 %v423, %v393
        %v426 = vrot.slane %v424, 1
        %v428 = vadd.f32 %v415, %v426
        %429 = vset.pattern.permute.xlu0 2
        %430 = vperm.xlu0 %429, %v394
        %v431 = vpop.permute.xlu0 %430
        %v433 = vlaneseq
        %v434 = vshrl.u32 %v433, 7
        %v435 = vsub.s32 0, %v434
        %v436 = vrot.slane %v431, %v435
        %v437 = vmul.f32 %v436, %v393
        %v439 = vrot.slane %v437, 2
        %v441 = vadd.f32 %v428, %v439
        %442 = vset.pattern.permute.xlu0 3
        %443 = vperm.xlu0 %442, %v394
        %v444 = vpop.permute.xlu0 %443
        %v446 = vlaneseq
        %v447 = vshrl.u32 %v446, 7
        %v448 = vsub.s32 0, %v447
        %v449 = vrot.slane %v444, %v448
        %v450 = vmul.f32 %v449, %v393
        %v452 = vrot.slane %v450, 3
        %v454 = vadd.f32 %v441, %v452
        %455 = vset.pattern.permute.xlu0 4
        %456 = vperm.xlu0 %455, %v394
        %v457 = vpop.permute.xlu0 %456
        %v459 = vlaneseq
        %v460 = vshrl.u32 %v459, 7
        %v461 = vsub.s32 0, %v460
        %v462 = vrot.slane %v457, %v461
        %v463 = vmul.f32 %v462, %v393
        %v465 = vrot.slane %v463, 4
        %v467 = vadd.f32 %v454, %v465
        %468 = vset.pattern.permute.xlu0 5
        %469 = vperm.xlu0 %468, %v394
        %v470 = vpop.permute.xlu0 %469
        %v472 = vlaneseq
        %v473 = vshrl.u32 %v472, 7
        %v474 = vsub.s32 0, %v473
        %v475 = vrot.slane %v470, %v474
        %v476 = vmul.f32 %v475, %v393
        %v478 = vrot.slane %v476, 5
        %v480 = vadd.f32 %v467, %v478
        %481 = vset.pattern.permute.xlu0 6
        %482 = vperm.xlu0 %481, %v394
        %v483 = vpop.permute.xlu0 %482
        %v485 = vlaneseq
        %v486 = vshrl.u32 %v485, 7
        %v487 = vsub.s32 0, %v486
        %v488 = vrot.slane %v483, %v487
        %v489 = vmul.f32 %v488, %v393
        %v491 = vrot.slane %v489, 6
        %v493 = vadd.f32 %v480, %v491
        %494 = vset.pattern.permute.xlu0 7
        %495 = vperm.xlu0 %494, %v394
        %v496 = vpop.permute.xlu0 %495
        %v498 = vlaneseq
        %v499 = vshrl.u32 %v498, 7
        %v500 = vsub.s32 0, %v499
        %v501 = vrot.slane %v496, %v500
        %v502 = vmul.f32 %v501, %v393
        %v504 = vrot.slane %v502, 7
        %v506 = vadd.f32 %v493, %v504
        %v507 = vsub.f32 0.0, %v506
        %v508 = vmul.f32 %v507, 1.442695
        %v509 = vpow.pop %v508
        %v510 = vadd.f32 %v509, 1.0
        %v511 = vrcp.pop %v510
        %v512 = vmul.f32 1.0, %v511
        %513 = vst [vmem:[%s270] sm:$0x1] %v512
        %s514 = sand.u32 %s183, 1
        %s515 = scalar_lea.sflag [#allocation4], %s514
        %s516 = sand.u32 %s183, 1
        %s517 = scalar_lea.vmem [#allocation3], %s516
        // Predicated region
        $region49: #{tpu_custom_call.1} parent=47 // pred_check
          %p518 = pneg %p193
        $region50: #{tpu_custom_call.1} parent=47 // pred_check_branch
          %520 = sbr.rel (%p518) target = $region52
        $region51: #{tpu_custom_call.1} parent=47 // pred_region
          %s522 = ssub.s32 16, 16
          %523 = vsyncadd %s515, %s522
          %s524 = smul.addr %s23, 16
          %s525 = scalar_lea.hbm %s7, %s524
          %s527 = sshll.u32 %s517, 4
          %s528 = int_to_ptr.vmem [resolvable:$true] %s527
          %530 = dma.vmem_to_hbm [thread:$0]  %s528, 16, %s525, %s515
        $region52: #{tpu_custom_call.1} parent=47 // pred_fallthru
          _
      $region48: #{tpu_custom_call.1} parent=5 // pred_fallthru
        _
      %p531 = scmp.le.s32.totalorder 2, %s18
      // Predicated region
      $region53: #{tpu_custom_call.1} parent=5 // pred_check
        %p532 = pneg %p531
      $region54: #{tpu_custom_call.1} parent=5 // pred_check_branch
        %534 = sbr.rel (%p532) target = $region56
      $region55: #{tpu_custom_call.1} parent=5 // pred_region
        %s535 = ssub.s32 %s18, 2
        // Predicated region
        $region57: #{tpu_custom_call.1} parent=55 // pred_check
          %p536 = pneg %p199
        $region58: #{tpu_custom_call.1} parent=55 // pred_check_branch
          %538 = sbr.rel (%p536) target = $region60
        $region59: #{tpu_custom_call.1} parent=55 // pred_region
          %s539 = sand.u32 %s184, 1
          %s540 = scalar_lea.sflag [#allocation4], %s539
          %s541 = sand.u32 %s184, 1
          %s542 = scalar_lea.vmem [#allocation3], %s541
          %543 = dma.done %s540, 16
        $region60: #{tpu_custom_call.1} parent=55 // pred_fallthru
          _
      $region56: #{tpu_custom_call.1} parent=5 // pred_fallthru
        _
    $region6: #{tpu_custom_call.1} parent=1 // loop_footer
      %s22 = sadd.s32 1, %s18
    $region7: #{tpu_custom_call.1} parent=1 // loop_footer_branch
      %17 = sbr.rel target = $region3
    $region8: #{tpu_custom_call.1} parent=1 // loop_exit
      _
    %544 = vsyncpa [#allocation4], 1
    %s545 = scalar_lea.sflag [#allocation4], 1
    %546 = vsyncpa %s545, 1

</llo_original>
